<compile_context>
chip_gen: v5e
topology: v5e:2x2
jax: 0.10.0
libtpu: 0.0.40
codegen_flags: <defaults>
</compile_context>

<pallas_src>
import functools

import jax
import jax.numpy as jnp
from jax import lax
from jax.experimental import pallas as pl
from jax.experimental.pallas import tpu as pltpu


# ----------------------------------------------------------------------------
# Kernel
# ----------------------------------------------------------------------------
def _mha_kernel(x_ref, wqkv_ref, bqkv_ref, wp_ref, bp_ref, o_ref, ctx_ref, *,
                num_heads: int):
    """One (Bt, N, E) batch tile per grid step.

    x_ref    : (Bt, N, E)  bf16 activations
    wqkv_ref : (E, 3E)     bf16 fused QKV weight, columns = [Q | K | V], each
                           head-major (h*dh + d); Q columns pre-scaled 1/sqrt(dh)
    bqkv_ref : (1, 3E)     f32 fused QKV bias (Q part pre-scaled)
    wp_ref   : (E, E)      bf16 output-projection weight, rows head-major
    bp_ref   : (1, E)      f32 output-projection bias
    o_ref    : (Bt, N, E)  output
    ctx_ref  : (Bt, N, E)  bf16 VMEM scratch holding per-head contexts
    """
    bt, n, e = x_ref.shape
    dh = e // num_heads

    # --- fused QKV projection: one full-depth MXU matmul over all Bt*N rows --
    x = x_ref[...].reshape(bt * n, e).astype(jnp.bfloat16)
    qkv = jnp.dot(x, wqkv_ref[...], preferred_element_type=jnp.float32)
    # Single whole-tensor bf16 cast right after the bias add (hoisted out of
    # the head loop); the f32 copy is dead from here on.
    qkv = (qkv + bqkv_ref[...]).astype(jnp.bfloat16).reshape(bt, n, 3 * e)

    q = qkv[:, :, 0 * e:1 * e]      # (Bt, N, E) bf16; Q already scaled 1/sqrt(dh)
    k = qkv[:, :, 1 * e:2 * e]
    v = qkv[:, :, 2 * e:3 * e]

    # Static loop over heads only (small, typically 8-16); the batch dimension
    # is handled by batched dot_generals, and each iteration ends in a ref
    # write, so no large f32 value stays live across iterations.
    for h in range(num_heads):
        cols = slice(h * dh, (h + 1) * dh)
        qh = q[:, :, cols]                                   # (Bt, N, dh) bf16
        kh = k[:, :, cols]
        vh = v[:, :, cols]

        # Batched QK^T (NT contraction over dh, batch over Bt) -> f32 scores.
        energy = jnp.einsum('bqd,bkd->bqk', qh, kh,
                            preferred_element_type=jnp.float32)   # (Bt, N, N)
        energy = energy - jnp.max(energy, axis=-1, keepdims=True)
        p = jnp.exp(energy)
        denom = jnp.sum(p, axis=-1, keepdims=True)                # (Bt, N, 1)

        # Unnormalized P @ V, then scale the small (N, dh) context instead of
        # the (N, N) probabilities (deferred softmax normalization).
        ctx = jnp.einsum('bqk,bkd->bqd', p.astype(jnp.bfloat16), vh,
                         preferred_element_type=jnp.float32)      # (Bt, N, dh)
        ctx = ctx * pl.reciprocal(denom, approx=True)

        ctx_ref[:, :, cols] = ctx.astype(jnp.bfloat16)

    # --- ONE full-depth (K = E) output projection after the head loop --------
    ctx_all = ctx_ref[...].reshape(bt * n, e)                     # bf16
    out = jnp.dot(ctx_all, wp_ref[...], preferred_element_type=jnp.float32)
    out = out + bp_ref[...]
    o_ref[...] = out.reshape(bt, n, e).astype(o_ref.dtype)


# ----------------------------------------------------------------------------
# One-time weight preparation (hoisted out of the per-call path)
# ----------------------------------------------------------------------------
def prepare_mha_params(params, *, num_heads: int):
    """Rearranges the PyTorch fused '(h d qkv)' QKV Linear into head-major
    contiguous [Q | K | V] blocks of one (E, 3E) weight, folds the 1/sqrt(dh)
    attention scale into the Q columns, and casts matmul weights to bf16."""
    w_qkv = params["w_qkv"]                      # (3E, E) PyTorch (out, in)
    b_qkv = params["b_qkv"]                      # (3E,)
    w_proj = params["w_proj"]                    # (E, E)
    b_proj = params["b_proj"]                    # (E,)

    E = w_proj.shape[0]
    dh = E // num_heads
    scale = 1.0 / float(dh) ** 0.5

    j = jnp.arange(E)                            # head-major index h*dh + d
    base = (j // dh) * (dh * 3) + (j % dh) * 3   # column in fused (h d qkv)
    cols = jnp.concatenate([base + 0, base + 1, base + 2])   # Q | K | V

    col_scale = jnp.concatenate([jnp.full((E,), scale, dtype=jnp.float32),
                                 jnp.ones((2 * E,), dtype=jnp.float32)])

    w_fused = (w_qkv.T[:, cols] * col_scale[None, :]).astype(jnp.bfloat16)  # (E, 3E)
    b_fused = (b_qkv[cols] * col_scale)[None, :].astype(jnp.float32)        # (1, 3E)
    wp = w_proj.T.astype(jnp.bfloat16)                                      # (E, E)
    bp = b_proj[None, :].astype(jnp.float32)                                # (1, E)

    return {"w_qkv_fused": w_fused, "b_qkv_fused": b_fused,
            "w_proj_t": wp, "b_proj": bp}


# ----------------------------------------------------------------------------
# Generation-aware tiling / VMEM policy
# ----------------------------------------------------------------------------
_MIB = 1024 * 1024


def _vmem_capacity_bytes() -> int:
    """Physical VMEM per TensorCore (64 MiB on v7x, 128 MiB on v5e/v6e)."""
    try:
        info = pltpu.get_tpu_info()
        for attr in ("vmem_capacity_bytes", "vmem_size_bytes"):
            cap = getattr(info, attr, None)
            if cap:
                return int(cap)
    except Exception:
        pass
    return 64 * _MIB            # conservative fallback (v7x-sized)


def _vmem_budget(cap: int) -> int:
    # Leave headroom for compiler-internal scratch: ~52 MiB on 64 MiB parts
    # (v7x), ~100 MiB on 128 MiB parts (v5e/v6e).
    return max(16 * _MIB, min(int(0.8 * cap), cap - 12 * _MIB))


def _vmem_need_bytes(bt: int, N: int, E: int, H: int, out_isz: int) -> int:
    """Per-grid-step VMEM estimate (bytes) for the chosen structure."""
    dh = E // H
    weights = 2 * (E * 3 * E * 2 + 3 * E * 4 + E * E * 2 + E * 4)   # 2 pipeline bufs
    io_blocks = 2 * bt * N * E * 2 + 2 * bt * N * E * out_isz       # x (bf16) + out
    ctx_scratch = bt * N * E * 2
    qkv = bt * N * 3 * E * (4 + 2)                                  # f32 + bf16 copy
    per_head = bt * N * N * (4 + 4 + 2) + bt * N * dh * 4           # scores + ctx
    proj = bt * N * E * 4                                           # f32 projection acc
    need = weights + io_blocks + ctx_scratch + qkv + per_head + proj
    return int(need * 1.25) + 2 * _MIB                              # modest headroom


def _choose_block_b(B: int, N: int, need_fn, budget: int, min_steps: int) -> int:
    """Largest batch tile that fits the VMEM budget, preferring >= min_steps
    grid steps (>= 2 per TensorCore on v7x) and MXU-aligned row counts."""
    divisors = [d for d in range(1, B + 1) if B % d == 0]
    fitting = [d for d in divisors if need_fn(d) <= budget]
    if not fitting:
        return 1   # TODO(synk): flash-style KV tiling when even bt=1 blows VMEM
    pool = fitting
    for target in (min_steps, 2):
        cand = [d for d in fitting if B // d >= target]
        if cand:
            pool = cand
            break
    aligned = ([d for d in pool if (d * N) % 256 == 0]
               or [d for d in pool if (d * N) % 128 == 0])
    pool = aligned or pool
    return max(pool)


# ----------------------------------------------------------------------------
# Wrapper
# ----------------------------------------------------------------------------
def multi_head_attention_pallas(x, prep, *, num_heads: int, block_b=None,
                                out_dtype=None):
    """x: (B, N, E).  prep: output of prepare_mha_params()."""
    B, N, E = x.shape
    out_dtype = x.dtype if out_dtype is None else out_dtype
    out_isz = jnp.dtype(out_dtype).itemsize

    # bf16 activations at the pallas_call boundary: halves input DMA bytes
    # and the double-buffered input block footprint.
    x_bf16 = x.astype(jnp.bfloat16)

    cap = _vmem_capacity_bytes()
    budget = _vmem_budget(cap)
    # 64 MiB parts (v7x) have 2 TensorCores sharing the 'parallel' grid axis:
    # aim for >= 2 steps per core so DMA/compute pipelining is live.
    min_steps = 4 if cap <= 64 * _MIB else 2

    need_fn = lambda d: _vmem_need_bytes(d, N, E, num_heads, out_isz)
    bt = _choose_block_b(B, N, need_fn, budget, min_steps) if block_b is None else block_b
    assert B % bt == 0, "block_b must divide B"

    # Accurate budget (no fudge factor), clamped to the generation-aware cap.
    vmem_limit = int(min(budget, max(16 * _MIB, need_fn(bt))))

    kernel = functools.partial(_mha_kernel, num_heads=num_heads)
    const2d = lambda i: (0, 0)

    return pl.pallas_call(
        kernel,
        out_shape=jax.ShapeDtypeStruct((B, N, E), out_dtype),
        grid_spec=pltpu.PrefetchScalarGridSpec(
            num_scalar_prefetch=0,
            grid=(B // bt,),
            in_specs=[
                pl.BlockSpec((bt, N, E), lambda i: (i, 0, 0)),   # x (bf16)
                pl.BlockSpec((E, 3 * E), const2d),               # fused QKV weight (bf16)
                pl.BlockSpec((1, 3 * E), const2d),               # fused QKV bias (f32)
                pl.BlockSpec((E, E), const2d),                   # proj weight (bf16)
                pl.BlockSpec((1, E), const2d),                   # proj bias (f32)
            ],
            out_specs=pl.BlockSpec((bt, N, E), lambda i: (i, 0, 0)),
            scratch_shapes=[pltpu.VMEM((bt, N, E), jnp.bfloat16)],
        ),
        compiler_params=pltpu.CompilerParams(
            dimension_semantics=("parallel",),
            vmem_limit_bytes=vmem_limit),
    )(x_bf16, prep["w_qkv_fused"], prep["b_qkv_fused"],
      prep["w_proj_t"], prep["b_proj"])


# ----------------------------------------------------------------------------
# Pure-JAX f32 reference (mirror of the PyTorch forward)
# ----------------------------------------------------------------------------
def _reference(x, params, *, num_heads: int):
    B, N, E = x.shape
    dh = E // num_heads
    qkv = x @ params["w_qkv"].T + params["b_qkv"]            # (B, N, 3E)
    qkv = qkv.reshape(B, N, num_heads, dh, 3)                # (h d qkv)
    qkv = jnp.transpose(qkv, (4, 0, 2, 1, 3))                # qkv b h n d
    q, k, v = qkv[0], qkv[1], qkv[2]
    energy = jnp.einsum("bhqd,bhkd->bhqk", q, k) / (E / num_heads) ** 0.5
    attn = jax.nn.softmax(energy, axis=-1)
    out = jnp.einsum("bhqk,bhkv->bhqv", attn, v)
    out = jnp.transpose(out, (0, 2, 1, 3)).reshape(B, N, E)  # b n (h d)
    return out @ params["w_proj"].T + params["b_proj"]


if __name__ == "__main__":
    # small shapes: batch=2, seq=8, embedding=32, heads=4 (head_dim=8)
    B, N, E, H = 2, 8, 32, 4

    key = jax.random.PRNGKey(0)
    kx, k1, k2, k3, k4 = jax.random.split(key, 5)

    x = jax.random.normal(kx, (B, N, E), dtype=jnp.float32)
    params = {
        "w_qkv": 0.02 * jax.random.normal(k1, (3 * E, E), dtype=jnp.float32),
        "b_qkv": 0.02 * jax.random.normal(k2, (3 * E,), dtype=jnp.float32),
        "w_proj": 0.02 * jax.random.normal(k3, (E, E), dtype=jnp.float32),
        "b_proj": 0.02 * jax.random.normal(k4, (E,), dtype=jnp.float32),
    }

    prep = prepare_mha_params(params, num_heads=H)   # one-time, off the hot path
    ref = _reference(x, params, num_heads=H)

    # default (VMEM/generation-driven) tiling, f32 output
    out = jax.block_until_ready(multi_head_attention_pallas(x, prep, num_heads=H))
    assert out.shape == (B, N, E)
    # bf16 MXU operands + approx softmax reciprocal -> relaxed tolerance vs f32 ref
    assert jnp.allclose(out, ref, atol=2e-3, rtol=2e-2), "mismatch vs reference"

    # all batches in one step + bf16 output (exercises merged-row projections
    # and the bf16 I/O path)
    out2 = jax.block_until_ready(
        multi_head_attention_pallas(x, prep, num_heads=H, block_b=B,
                                    out_dtype=jnp.bfloat16))
    assert out2.dtype == jnp.bfloat16
    assert jnp.allclose(out2.astype(jnp.float32), ref, atol=3e-3, rtol=3e-2), \
        "mismatch vs reference (block_b=B, bf16 out)"

    print("KERNEL_OK")
</pallas_src>

<mosaic_0001>
module attributes {stable_mosaic.version = 11 : i64} {
  func.func @_mha_kernel(%arg0: i32, %arg1: memref<1x8x32xbf16, #tpu.memory_space<vmem>>, %arg2: memref<32x96xbf16, #tpu.memory_space<vmem>>, %arg3: memref<1x96xf32, #tpu.memory_space<vmem>>, %arg4: memref<32x32xbf16, #tpu.memory_space<vmem>>, %arg5: memref<1x32xf32, #tpu.memory_space<vmem>>, %arg6: memref<1x8x32xf32, #tpu.memory_space<vmem>>, %arg7: memref<1x8x32xbf16, #tpu.memory_space<vmem>>) attributes {dimension_semantics = [#tpu.dimension_semantics<parallel>], iteration_bounds = array<i64: 2>, scalar_prefetch = 0 : i64, scratch_operands = 1 : i64, tpu.core_type = #tpu.core_type<tc>, window_params = [{transform_indices = @transform_0, window_bounds = array<i64: 1, 8, 32>}, {pipeline_mode = #tpu.pipeline_mode<synchronous>, transform_indices = @transform_1, window_bounds = array<i64: 32, 96>}, {pipeline_mode = #tpu.pipeline_mode<synchronous>, transform_indices = @transform_2, window_bounds = array<i64: 1, 96>}, {pipeline_mode = #tpu.pipeline_mode<synchronous>, transform_indices = @transform_3, window_bounds = array<i64: 32, 32>}, {pipeline_mode = #tpu.pipeline_mode<synchronous>, transform_indices = @transform_4, window_bounds = array<i64: 1, 32>}, {transform_indices = @transform_5, window_bounds = array<i64: 1, 8, 32>}]} {
    %c0 = arith.constant 0 : index
    %c0_0 = arith.constant 0 : index
    %c0_1 = arith.constant 0 : index
    %0 = vector.load %arg1[%c0, %c0_0, %c0_1] : memref<1x8x32xbf16, #tpu.memory_space<vmem>>, vector<1x8x32xbf16>
    %1 = vector.shape_cast %0 : vector<1x8x32xbf16> to vector<8x32xbf16>
    %c0_2 = arith.constant 0 : index
    %c0_3 = arith.constant 0 : index
    %2 = vector.load %arg2[%c0_2, %c0_3] : memref<32x96xbf16, #tpu.memory_space<vmem>>, vector<32x96xbf16>
    %cst = arith.constant dense<0.000000e+00> : vector<8x96xf32>
    %3 = tpu.matmul %1, %2, %cst {dimension_numbers = #tpu.dot_dimension_numbers<[1], [0], [0], [1], [0, 0, 1, 1], [], []>} : vector<8x32xbf16>, vector<32x96xbf16>, vector<8x96xf32> -> vector<8x96xf32>
    %c0_4 = arith.constant 0 : index
    %c0_5 = arith.constant 0 : index
    %4 = vector.load %arg3[%c0_4, %c0_5] : memref<1x96xf32, #tpu.memory_space<vmem>>, vector<1x96xf32>
    %5 = vector.broadcast %4 : vector<1x96xf32> to vector<8x96xf32>
    %6 = arith.addf %3, %5 : vector<8x96xf32>
    %7 = arith.truncf %6 : vector<8x96xf32> to vector<8x96xbf16>
    %8 = vector.shape_cast %7 : vector<8x96xbf16> to vector<1x8x96xbf16>
    %9 = vector.extract_strided_slice %8 {offsets = [0, 0, 0], sizes = [1, 8, 32], strides = [1, 1, 1]} : vector<1x8x96xbf16> to vector<1x8x32xbf16>
    %10 = vector.extract_strided_slice %8 {offsets = [0, 0, 32], sizes = [1, 8, 32], strides = [1, 1, 1]} : vector<1x8x96xbf16> to vector<1x8x32xbf16>
    %11 = vector.extract_strided_slice %8 {offsets = [0, 0, 64], sizes = [1, 8, 32], strides = [1, 1, 1]} : vector<1x8x96xbf16> to vector<1x8x32xbf16>
    %12 = vector.extract_strided_slice %9 {offsets = [0, 0, 0], sizes = [1, 8, 8], strides = [1, 1, 1]} : vector<1x8x32xbf16> to vector<1x8x8xbf16>
    %13 = vector.extract_strided_slice %10 {offsets = [0, 0, 0], sizes = [1, 8, 8], strides = [1, 1, 1]} : vector<1x8x32xbf16> to vector<1x8x8xbf16>
    %14 = vector.extract_strided_slice %11 {offsets = [0, 0, 0], sizes = [1, 8, 8], strides = [1, 1, 1]} : vector<1x8x32xbf16> to vector<1x8x8xbf16>
    "tpu.trace_start"() <{level = 10 : i32, message = "bqd,bkd->bqk"}> : () -> ()
    %cst_6 = arith.constant dense<0.000000e+00> : vector<1x8x8xf32>
    %15 = tpu.matmul %12, %13, %cst_6 {dimension_numbers = #tpu.dot_dimension_numbers<[2], [2], [1], [1], [0, 0, 0, 1, 1, 1], [0], [0]>} : vector<1x8x8xbf16>, vector<1x8x8xbf16>, vector<1x8x8xf32> -> vector<1x8x8xf32>
    "tpu.trace_stop"() : () -> ()
    %cst_7 = arith.constant dense<0xFF800000> : vector<1x8xf32>
    %16 = vector.multi_reduction <maximumf>, %15, %cst_7 [2] : vector<1x8x8xf32> to vector<1x8xf32>
    %17 = vector.shape_cast %16 : vector<1x8xf32> to vector<1x8x1xf32>
    %18 = vector.broadcast %17 : vector<1x8x1xf32> to vector<1x8x8xf32>
    %19 = arith.subf %15, %18 : vector<1x8x8xf32>
    %20 = math.exp %19 : vector<1x8x8xf32>
    %cst_8 = arith.constant dense<0.000000e+00> : vector<1x8xf32>
    %21 = vector.multi_reduction <add>, %20, %cst_8 [2] : vector<1x8x8xf32> to vector<1x8xf32>
    %22 = vector.shape_cast %21 : vector<1x8xf32> to vector<1x8x1xf32>
    %23 = arith.truncf %20 : vector<1x8x8xf32> to vector<1x8x8xbf16>
    "tpu.trace_start"() <{level = 10 : i32, message = "bqk,bkd->bqd"}> : () -> ()
    %cst_9 = arith.constant dense<0.000000e+00> : vector<1x8x8xf32>
    %24 = tpu.matmul %23, %14, %cst_9 {dimension_numbers = #tpu.dot_dimension_numbers<[2], [1], [1], [2], [0, 0, 0, 1, 1, 2], [0], [0]>} : vector<1x8x8xbf16>, vector<1x8x8xbf16>, vector<1x8x8xf32> -> vector<1x8x8xf32>
    "tpu.trace_stop"() : () -> ()
    %25 = tpu.reciprocal %22 {approx = true} : vector<1x8x1xf32> -> vector<1x8x1xf32>
    %26 = vector.broadcast %25 : vector<1x8x1xf32> to vector<1x8x8xf32>
    %27 = arith.mulf %24, %26 : vector<1x8x8xf32>
    %28 = arith.truncf %27 : vector<1x8x8xf32> to vector<1x8x8xbf16>
    %c0_10 = arith.constant 0 : index
    %c0_11 = arith.constant 0 : index
    %c0_12 = arith.constant 0 : index
    %29 = vector.load %arg7[%c0_10, %c0_11, %c0_12] : memref<1x8x32xbf16, #tpu.memory_space<vmem>>, vector<1x8x8xbf16>
    tpu.vector_store %arg7[%c0_10, %c0_11, %c0_12], %28 {strides = array<i32>} : memref<1x8x32xbf16, #tpu.memory_space<vmem>>, vector<1x8x8xbf16>,
    %30 = vector.extract_strided_slice %9 {offsets = [0, 0, 8], sizes = [1, 8, 8], strides = [1, 1, 1]} : vector<1x8x32xbf16> to vector<1x8x8xbf16>
    %31 = vector.extract_strided_slice %10 {offsets = [0, 0, 8], sizes = [1, 8, 8], strides = [1, 1, 1]} : vector<1x8x32xbf16> to vector<1x8x8xbf16>
    %32 = vector.extract_strided_slice %11 {offsets = [0, 0, 8], sizes = [1, 8, 8], strides = [1, 1, 1]} : vector<1x8x32xbf16> to vector<1x8x8xbf16>
    "tpu.trace_start"() <{level = 10 : i32, message = "bqd,bkd->bqk"}> : () -> ()
    %cst_13 = arith.constant dense<0.000000e+00> : vector<1x8x8xf32>
    %33 = tpu.matmul %30, %31, %cst_13 {dimension_numbers = #tpu.dot_dimension_numbers<[2], [2], [1], [1], [0, 0, 0, 1, 1, 1], [0], [0]>} : vector<1x8x8xbf16>, vector<1x8x8xbf16>, vector<1x8x8xf32> -> vector<1x8x8xf32>
    "tpu.trace_stop"() : () -> ()
    %cst_14 = arith.constant dense<0xFF800000> : vector<1x8xf32>
    %34 = vector.multi_reduction <maximumf>, %33, %cst_14 [2] : vector<1x8x8xf32> to vector<1x8xf32>
    %35 = vector.shape_cast %34 : vector<1x8xf32> to vector<1x8x1xf32>
    %36 = vector.broadcast %35 : vector<1x8x1xf32> to vector<1x8x8xf32>
    %37 = arith.subf %33, %36 : vector<1x8x8xf32>
    %38 = math.exp %37 : vector<1x8x8xf32>
    %cst_15 = arith.constant dense<0.000000e+00> : vector<1x8xf32>
    %39 = vector.multi_reduction <add>, %38, %cst_15 [2] : vector<1x8x8xf32> to vector<1x8xf32>
    %40 = vector.shape_cast %39 : vector<1x8xf32> to vector<1x8x1xf32>
    %41 = arith.truncf %38 : vector<1x8x8xf32> to vector<1x8x8xbf16>
    "tpu.trace_start"() <{level = 10 : i32, message = "bqk,bkd->bqd"}> : () -> ()
    %cst_16 = arith.constant dense<0.000000e+00> : vector<1x8x8xf32>
    %42 = tpu.matmul %41, %32, %cst_16 {dimension_numbers = #tpu.dot_dimension_numbers<[2], [1], [1], [2], [0, 0, 0, 1, 1, 2], [0], [0]>} : vector<1x8x8xbf16>, vector<1x8x8xbf16>, vector<1x8x8xf32> -> vector<1x8x8xf32>
    "tpu.trace_stop"() : () -> ()
    %43 = tpu.reciprocal %40 {approx = true} : vector<1x8x1xf32> -> vector<1x8x1xf32>
    %44 = vector.broadcast %43 : vector<1x8x1xf32> to vector<1x8x8xf32>
    %45 = arith.mulf %42, %44 : vector<1x8x8xf32>
    %46 = arith.truncf %45 : vector<1x8x8xf32> to vector<1x8x8xbf16>
    %c0_17 = arith.constant 0 : index
    %c0_18 = arith.constant 0 : index
    %c8 = arith.constant 8 : index
    %47 = vector.load %arg7[%c0_17, %c0_18, %c8] : memref<1x8x32xbf16, #tpu.memory_space<vmem>>, vector<1x8x8xbf16>
    tpu.vector_store %arg7[%c0_17, %c0_18, %c8], %46 {strides = array<i32>} : memref<1x8x32xbf16, #tpu.memory_space<vmem>>, vector<1x8x8xbf16>,
    %48 = vector.extract_strided_slice %9 {offsets = [0, 0, 16], sizes = [1, 8, 8], strides = [1, 1, 1]} : vector<1x8x32xbf16> to vector<1x8x8xbf16>
    %49 = vector.extract_strided_slice %10 {offsets = [0, 0, 16], sizes = [1, 8, 8], strides = [1, 1, 1]} : vector<1x8x32xbf16> to vector<1x8x8xbf16>
    %50 = vector.extract_strided_slice %11 {offsets = [0, 0, 16], sizes = [1, 8, 8], strides = [1, 1, 1]} : vector<1x8x32xbf16> to vector<1x8x8xbf16>
    "tpu.trace_start"() <{level = 10 : i32, message = "bqd,bkd->bqk"}> : () -> ()
    %cst_19 = arith.constant dense<0.000000e+00> : vector<1x8x8xf32>
    %51 = tpu.matmul %48, %49, %cst_19 {dimension_numbers = #tpu.dot_dimension_numbers<[2], [2], [1], [1], [0, 0, 0, 1, 1, 1], [0], [0]>} : vector<1x8x8xbf16>, vector<1x8x8xbf16>, vector<1x8x8xf32> -> vector<1x8x8xf32>
    "tpu.trace_stop"() : () -> ()
    %cst_20 = arith.constant dense<0xFF800000> : vector<1x8xf32>
    %52 = vector.multi_reduction <maximumf>, %51, %cst_20 [2] : vector<1x8x8xf32> to vector<1x8xf32>
    %53 = vector.shape_cast %52 : vector<1x8xf32> to vector<1x8x1xf32>
    %54 = vector.broadcast %53 : vector<1x8x1xf32> to vector<1x8x8xf32>
    %55 = arith.subf %51, %54 : vector<1x8x8xf32>
    %56 = math.exp %55 : vector<1x8x8xf32>
    %cst_21 = arith.constant dense<0.000000e+00> : vector<1x8xf32>
    %57 = vector.multi_reduction <add>, %56, %cst_21 [2] : vector<1x8x8xf32> to vector<1x8xf32>
    %58 = vector.shape_cast %57 : vector<1x8xf32> to vector<1x8x1xf32>
    %59 = arith.truncf %56 : vector<1x8x8xf32> to vector<1x8x8xbf16>
    "tpu.trace_start"() <{level = 10 : i32, message = "bqk,bkd->bqd"}> : () -> ()
    %cst_22 = arith.constant dense<0.000000e+00> : vector<1x8x8xf32>
    %60 = tpu.matmul %59, %50, %cst_22 {dimension_numbers = #tpu.dot_dimension_numbers<[2], [1], [1], [2], [0, 0, 0, 1, 1, 2], [0], [0]>} : vector<1x8x8xbf16>, vector<1x8x8xbf16>, vector<1x8x8xf32> -> vector<1x8x8xf32>
    "tpu.trace_stop"() : () -> ()
    %61 = tpu.reciprocal %58 {approx = true} : vector<1x8x1xf32> -> vector<1x8x1xf32>
    %62 = vector.broadcast %61 : vector<1x8x1xf32> to vector<1x8x8xf32>
    %63 = arith.mulf %60, %62 : vector<1x8x8xf32>
    %64 = arith.truncf %63 : vector<1x8x8xf32> to vector<1x8x8xbf16>
    %c0_23 = arith.constant 0 : index
    %c0_24 = arith.constant 0 : index
    %c16 = arith.constant 16 : index
    %65 = vector.load %arg7[%c0_23, %c0_24, %c16] : memref<1x8x32xbf16, #tpu.memory_space<vmem>>, vector<1x8x8xbf16>
    tpu.vector_store %arg7[%c0_23, %c0_24, %c16], %64 {strides = array<i32>} : memref<1x8x32xbf16, #tpu.memory_space<vmem>>, vector<1x8x8xbf16>,
    %66 = vector.extract_strided_slice %9 {offsets = [0, 0, 24], sizes = [1, 8, 8], strides = [1, 1, 1]} : vector<1x8x32xbf16> to vector<1x8x8xbf16>
    %67 = vector.extract_strided_slice %10 {offsets = [0, 0, 24], sizes = [1, 8, 8], strides = [1, 1, 1]} : vector<1x8x32xbf16> to vector<1x8x8xbf16>
    %68 = vector.extract_strided_slice %11 {offsets = [0, 0, 24], sizes = [1, 8, 8], strides = [1, 1, 1]} : vector<1x8x32xbf16> to vector<1x8x8xbf16>
    "tpu.trace_start"() <{level = 10 : i32, message = "bqd,bkd->bqk"}> : () -> ()
    %cst_25 = arith.constant dense<0.000000e+00> : vector<1x8x8xf32>
    %69 = tpu.matmul %66, %67, %cst_25 {dimension_numbers = #tpu.dot_dimension_numbers<[2], [2], [1], [1], [0, 0, 0, 1, 1, 1], [0], [0]>} : vector<1x8x8xbf16>, vector<1x8x8xbf16>, vector<1x8x8xf32> -> vector<1x8x8xf32>
    "tpu.trace_stop"() : () -> ()
    %cst_26 = arith.constant dense<0xFF800000> : vector<1x8xf32>
    %70 = vector.multi_reduction <maximumf>, %69, %cst_26 [2] : vector<1x8x8xf32> to vector<1x8xf32>
    %71 = vector.shape_cast %70 : vector<1x8xf32> to vector<1x8x1xf32>
    %72 = vector.broadcast %71 : vector<1x8x1xf32> to vector<1x8x8xf32>
    %73 = arith.subf %69, %72 : vector<1x8x8xf32>
    %74 = math.exp %73 : vector<1x8x8xf32>
    %cst_27 = arith.constant dense<0.000000e+00> : vector<1x8xf32>
    %75 = vector.multi_reduction <add>, %74, %cst_27 [2] : vector<1x8x8xf32> to vector<1x8xf32>
    %76 = vector.shape_cast %75 : vector<1x8xf32> to vector<1x8x1xf32>
    %77 = arith.truncf %74 : vector<1x8x8xf32> to vector<1x8x8xbf16>
    "tpu.trace_start"() <{level = 10 : i32, message = "bqk,bkd->bqd"}> : () -> ()
    %cst_28 = arith.constant dense<0.000000e+00> : vector<1x8x8xf32>
    %78 = tpu.matmul %77, %68, %cst_28 {dimension_numbers = #tpu.dot_dimension_numbers<[2], [1], [1], [2], [0, 0, 0, 1, 1, 2], [0], [0]>} : vector<1x8x8xbf16>, vector<1x8x8xbf16>, vector<1x8x8xf32> -> vector<1x8x8xf32>
    "tpu.trace_stop"() : () -> ()
    %79 = tpu.reciprocal %76 {approx = true} : vector<1x8x1xf32> -> vector<1x8x1xf32>
    %80 = vector.broadcast %79 : vector<1x8x1xf32> to vector<1x8x8xf32>
    %81 = arith.mulf %78, %80 : vector<1x8x8xf32>
    %82 = arith.truncf %81 : vector<1x8x8xf32> to vector<1x8x8xbf16>
    %c0_29 = arith.constant 0 : index
    %c0_30 = arith.constant 0 : index
    %c24 = arith.constant 24 : index
    %83 = vector.load %arg7[%c0_29, %c0_30, %c24] : memref<1x8x32xbf16, #tpu.memory_space<vmem>>, vector<1x8x8xbf16>
    tpu.vector_store %arg7[%c0_29, %c0_30, %c24], %82 {strides = array<i32>} : memref<1x8x32xbf16, #tpu.memory_space<vmem>>, vector<1x8x8xbf16>,
    %c0_31 = arith.constant 0 : index
    %c0_32 = arith.constant 0 : index
    %c0_33 = arith.constant 0 : index
    %84 = vector.load %arg7[%c0_31, %c0_32, %c0_33] : memref<1x8x32xbf16, #tpu.memory_space<vmem>>, vector<1x8x32xbf16>
    %85 = vector.shape_cast %84 : vector<1x8x32xbf16> to vector<8x32xbf16>
    %c0_34 = arith.constant 0 : index
    %c0_35 = arith.constant 0 : index
    %86 = vector.load %arg4[%c0_34, %c0_35] : memref<32x32xbf16, #tpu.memory_space<vmem>>, vector<32x32xbf16>
    %cst_36 = arith.constant dense<0.000000e+00> : vector<8x32xf32>
    %87 = tpu.matmul %85, %86, %cst_36 {dimension_numbers = #tpu.dot_dimension_numbers<[1], [0], [0], [1], [0, 0, 1, 1], [], []>} : vector<8x32xbf16>, vector<32x32xbf16>, vector<8x32xf32> -> vector<8x32xf32>
    %c0_37 = arith.constant 0 : index
    %c0_38 = arith.constant 0 : index
    %88 = vector.load %arg5[%c0_37, %c0_38] : memref<1x32xf32, #tpu.memory_space<vmem>>, vector<1x32xf32>
    %89 = vector.broadcast %88 : vector<1x32xf32> to vector<8x32xf32>
    %90 = arith.addf %87, %89 : vector<8x32xf32>
    %91 = vector.shape_cast %90 : vector<8x32xf32> to vector<1x8x32xf32>
    %c0_39 = arith.constant 0 : index
    %c0_40 = arith.constant 0 : index
    %c0_41 = arith.constant 0 : index
    %92 = vector.load %arg6[%c0_39, %c0_40, %c0_41] : memref<1x8x32xf32, #tpu.memory_space<vmem>>, vector<1x8x32xf32>
    tpu.vector_store %arg6[%c0_39, %c0_40, %c0_41], %91 {strides = array<i32>} : memref<1x8x32xf32, #tpu.memory_space<vmem>>, vector<1x8x32xf32>,
    return
  }
  func.func @transform_0(%arg0: i32) -> (i32, i32, i32) {
    %c0_i32 = arith.constant 0 : i32
    %c0_i32_0 = arith.constant 0 : i32
    %c0_i32_1 = arith.constant 0 : i32
    return %arg0, %c0_i32, %c0_i32_0 : i32, i32, i32
  }
  func.func @transform_1(%arg0: i32) -> (i32, i32) {
    %c0_i32 = arith.constant 0 : i32
    %c0_i32_0 = arith.constant 0 : i32
    %c0_i32_1 = arith.constant 0 : i32
    return %c0_i32, %c0_i32_0 : i32, i32
  }
  func.func @transform_2(%arg0: i32) -> (i32, i32) {
    %c0_i32 = arith.constant 0 : i32
    %c0_i32_0 = arith.constant 0 : i32
    %c0_i32_1 = arith.constant 0 : i32
    return %c0_i32, %c0_i32_0 : i32, i32
  }
  func.func @transform_3(%arg0: i32) -> (i32, i32) {
    %c0_i32 = arith.constant 0 : i32
    %c0_i32_0 = arith.constant 0 : i32
    %c0_i32_1 = arith.constant 0 : i32
    return %c0_i32, %c0_i32_0 : i32, i32
  }
  func.func @transform_4(%arg0: i32) -> (i32, i32) {
    %c0_i32 = arith.constant 0 : i32
    %c0_i32_0 = arith.constant 0 : i32
    %c0_i32_1 = arith.constant 0 : i32
    return %c0_i32, %c0_i32_0 : i32, i32
  }
  func.func @transform_5(%arg0: i32) -> (i32, i32, i32) {
    %c0_i32 = arith.constant 0 : i32
    %c0_i32_0 = arith.constant 0 : i32
    %c0_i32_1 = arith.constant 0 : i32
    return %arg0, %c0_i32, %c0_i32_0 : i32, i32, i32
  }
}

</mosaic_0001>

<llo_original>
// kernel: tpu_custom_call.1
$region0: #{tpu_custom_call.1}
  #allocation0 [shape = 'u32[]', space=smem, size = 0x4, offset = 0x4, fixed_abs, tag = 'smem constant byte address 0x4 - core index']
  #allocation1 [shape = 'u32[72,128]{1,0:T(1,128)}', space=vmem, size = 0x9000, scoped, tag = 'internal scratch']
  #allocation2 [shape = 'bf16[1,8,32]{2,1,0:T(8,128)(2,1)}', space=vmem, size = 0x800, scoped, tag = 'scratch operand']
  %s0 = inlined_call_operand.hbm [shape: bf16[2,8,32], index: 0, kind: input, shape index: {}]
  %s1 = inlined_call_operand.hbm [shape: bf16[32,96], index: 1, kind: input, shape index: {}]
  %s2 = inlined_call_operand.vmem [shape: f32[1,96], index: 2, kind: input, shape index: {}]
  %s3 = inlined_call_operand.hbm [shape: bf16[32,32], index: 3, kind: input, shape index: {}]
  %s4 = inlined_call_operand.vmem [shape: f32[1,32], index: 4, kind: input, shape index: {}]
  %s5 = inlined_call_operand.hbm [shape: f32[2,8,32], index: 5, kind: output, shape index: {}]
  %s6 = sld [smem:[#allocation0]]
  $region65: #{tpu_custom_call.1} parent=0
    _
  %s8 = ssub.s32 1, %s6
  %s9 = scalar_select 0, %s8, %s6
  $region1: #{tpu_custom_call.1} parent=0
    #allocation3 [shape = 'u8[4096]{0}', space=vmem, size = 0x1000, scoped, tag = 'input window, operand 0']
    #allocation4 [shape = 's32[2]{0}', space=sflag, size = 0x8, scoped, tag = 'scoped memory for tpu_custom_call.1']
    #allocation5 [shape = 's32[2]{0}', space=sflag, size = 0x8, scoped, tag = 'scoped memory for tpu_custom_call.1']
    #allocation6 [shape = 'u8[8192]{0}', space=vmem, size = 0x2000, scoped, tag = 'input window, operand 1, single buffered']
    #allocation7 [shape = 's32[1]{0}', space=sflag, size = 0x4, scoped, tag = 'scoped memory for tpu_custom_call.1']
    #allocation8 [shape = 'u8[8192]{0}', space=vmem, size = 0x2000, scoped, tag = 'input window, operand 3, single buffered']
    #allocation9 [shape = 'u8[8192]{0}', space=vmem, size = 0x2000, scoped, tag = 'output window, operand 0']
    %10 = vsyncpa [#allocation4], 0
    %s11 = scalar_lea.sflag [#allocation4], 1
    %12 = vsyncpa %s11, 0
    %13 = vsyncpa [#allocation7], 0
    %14 = vsyncpa [#allocation5], 0
    %s15 = scalar_lea.sflag [#allocation5], 1
    %16 = vsyncpa %s15, 0
    loop: start=0, step=1, limit=4
    $region2: #{tpu_custom_call.1} parent=1 // loop_pre_header
      _
    $region3: #{tpu_custom_call.1} parent=1 // loop_header
      %s18 = sphi 0, %s22
      %p19 = scmp.ge.s32.totalorder %s18, 4
      %s28 = sphi 0, %s30
      %s31 = sphi 0, %s28
      %s32 = sphi 0, %s31
      %s48 = sphi 0, %s32
      %s52 = sphi 0, %s52
      %s54 = sphi 0, %s52
      %s55 = sphi 0, %s54
      %s69 = sphi 0, %s55
      %s73 = sphi 0, %s73
      %s75 = sphi 0, %s73
      %s76 = sphi 0, %s75
      %s90 = sphi 0, %s76
      %s94 = sphi 0, %s94
      %s96 = sphi 0, %s94
      %s97 = sphi 0, %s96
      %s111 = sphi 0, %s97
      %s115 = sphi 0, %s115
      %s117 = sphi 0, %s115
      %s118 = sphi 0, %s117
      %s132 = sphi 0, %s118
      %s138 = sphi 0, %s140
      %s141 = sphi 0, %s138
      %s142 = sphi 0, %s141
      %s158 = sphi 0, %s142
    $region4: #{tpu_custom_call.1} parent=1 // loop_header_branch
      %21 = sbr.rel (%p19) target = $region8
    $region5: #{tpu_custom_call.1} parent=1 // loop_body
      %s23 = ssub.s32 %s18, 1
      %s24 = ssub.s32 %s18, 2
      %s25 = sadd.s32 %s18, 1
      %s26 = ssub.s32 %s18, %s25
      %p27 = scmp.eq.s32.totalorder %s26, 0
      %s29 = sadd.s32 %s28, 1
      %s30 = scalar_select %p27, %s28, %s29
      %p33 = pneg %p27
      %p34 = scmp.eq.s32.totalorder %s18, 1
      %p35 = por %p33, %p34
      %p36 = scmp.ne.s32.totalorder %s28, %s31
      %p37 = scmp.eq.s32.totalorder %s18, 0
      %p38 = por %p36, %p37
      %p39 = scmp.ne.s32.totalorder %s28, %s31
      %p40 = scmp.eq.s32.totalorder %s23, 1
      %p41 = por %p39, %p40
      %p42 = scmp.ne.s32.totalorder %s31, %s32
      %p43 = scmp.eq.s32.totalorder %s23, 0
      %p44 = por %p42, %p43
      %p45 = scmp.ne.s32.totalorder %s31, %s32
      %p46 = scmp.eq.s32.totalorder %s24, 1
      %p47 = por %p45, %p46
      %p49 = scmp.ne.s32.totalorder %s32, %s48
      %p50 = scmp.eq.s32.totalorder %s24, 0
      %p51 = por %p49, %p50
      %s53 = sadd.s32 %s52, 1
      %p56 = scmp.eq.s32.totalorder %s18, 1
      %p57 = scmp.ne.s32.totalorder %s52, %s54
      %p58 = scmp.eq.s32.totalorder %s18, 0
      %p59 = por %p57, %p58
      %p60 = scmp.ne.s32.totalorder %s52, %s54
      %p61 = scmp.eq.s32.totalorder %s23, 1
      %p62 = por %p60, %p61
      %p63 = scmp.ne.s32.totalorder %s54, %s55
      %p64 = scmp.eq.s32.totalorder %s23, 0
      %p65 = por %p63, %p64
      %p66 = scmp.ne.s32.totalorder %s54, %s55
      %p67 = scmp.eq.s32.totalorder %s24, 1
      %p68 = por %p66, %p67
      %p70 = scmp.ne.s32.totalorder %s55, %s69
      %p71 = scmp.eq.s32.totalorder %s24, 0
      %p72 = por %p70, %p71
      %s74 = sadd.s32 %s73, 1
      %p77 = scmp.eq.s32.totalorder %s18, 1
      %p78 = scmp.ne.s32.totalorder %s73, %s75
      %p79 = scmp.eq.s32.totalorder %s18, 0
      %p80 = por %p78, %p79
      %p81 = scmp.ne.s32.totalorder %s73, %s75
      %p82 = scmp.eq.s32.totalorder %s23, 1
      %p83 = por %p81, %p82
      %p84 = scmp.ne.s32.totalorder %s75, %s76
      %p85 = scmp.eq.s32.totalorder %s23, 0
      %p86 = por %p84, %p85
      %p87 = scmp.ne.s32.totalorder %s75, %s76
      %p88 = scmp.eq.s32.totalorder %s24, 1
      %p89 = por %p87, %p88
      %p91 = scmp.ne.s32.totalorder %s76, %s90
      %p92 = scmp.eq.s32.totalorder %s24, 0
      %p93 = por %p91, %p92
      %s95 = sadd.s32 %s94, 1
      %p98 = scmp.eq.s32.totalorder %s18, 1
      %p99 = scmp.ne.s32.totalorder %s94, %s96
      %p100 = scmp.eq.s32.totalorder %s18, 0
      %p101 = por %p99, %p100
      %p102 = scmp.ne.s32.totalorder %s94, %s96
      %p103 = scmp.eq.s32.totalorder %s23, 1
      %p104 = por %p102, %p103
      %p105 = scmp.ne.s32.totalorder %s96, %s97
      %p106 = scmp.eq.s32.totalorder %s23, 0
      %p107 = por %p105, %p106
      %p108 = scmp.ne.s32.totalorder %s96, %s97
      %p109 = scmp.eq.s32.totalorder %s24, 1
      %p110 = por %p108, %p109
      %p112 = scmp.ne.s32.totalorder %s97, %s111
      %p113 = scmp.eq.s32.totalorder %s24, 0
      %p114 = por %p112, %p113
      %s116 = sadd.s32 %s115, 1
      %p119 = scmp.eq.s32.totalorder %s18, 1
      %p120 = scmp.ne.s32.totalorder %s115, %s117
      %p121 = scmp.eq.s32.totalorder %s18, 0
      %p122 = por %p120, %p121
      %p123 = scmp.ne.s32.totalorder %s115, %s117
      %p124 = scmp.eq.s32.totalorder %s23, 1
      %p125 = por %p123, %p124
      %p126 = scmp.ne.s32.totalorder %s117, %s118
      %p127 = scmp.eq.s32.totalorder %s23, 0
      %p128 = por %p126, %p127
      %p129 = scmp.ne.s32.totalorder %s117, %s118
      %p130 = scmp.eq.s32.totalorder %s24, 1
      %p131 = por %p129, %p130
      %p133 = scmp.ne.s32.totalorder %s118, %s132
      %p134 = scmp.eq.s32.totalorder %s24, 0
      %p135 = por %p133, %p134
      %s136 = ssub.s32 %s18, %s25
      %p137 = scmp.eq.s32.totalorder %s136, 0
      %s139 = sadd.s32 %s138, 1
      %s140 = scalar_select %p137, %s138, %s139
      %p143 = pneg %p137
      %p144 = scmp.eq.s32.totalorder %s18, 1
      %p145 = por %p143, %p144
      %p146 = scmp.ne.s32.totalorder %s138, %s141
      %p147 = scmp.eq.s32.totalorder %s18, 0
      %p148 = por %p146, %p147
      %p149 = scmp.ne.s32.totalorder %s138, %s141
      %p150 = scmp.eq.s32.totalorder %s23, 1
      %p151 = por %p149, %p150
      %p152 = scmp.ne.s32.totalorder %s141, %s142
      %p153 = scmp.eq.s32.totalorder %s23, 0
      %p154 = por %p152, %p153
      %p155 = scmp.ne.s32.totalorder %s141, %s142
      %p156 = scmp.eq.s32.totalorder %s24, 1
      %p157 = por %p155, %p156
      %p159 = scmp.ne.s32.totalorder %s142, %s158
      %p160 = scmp.eq.s32.totalorder %s24, 0
      %p161 = por %p159, %p160
      %p162 = scmp.le.s32.totalorder 1, %s18
      %p163 = scmp.lt.s32.totalorder %s18, 3
      %p164 = pnand %p162, %p163
      %p165 = pneg %p164
      // Predicated region
      $region9: #{tpu_custom_call.1} parent=5 // pred_check
        _
      $region10: #{tpu_custom_call.1} parent=5 // pred_check_branch
        %167 = sbr.rel (%p164) target = $region12
      $region11: #{tpu_custom_call.1} parent=5 // pred_region
        %s168 = ssub.s32 %s18, 1
        // Predicated region
        $region13: #{tpu_custom_call.1} parent=11 // pred_check
          %p169 = pneg %p65
        $region14: #{tpu_custom_call.1} parent=11 // pred_check_branch
          %171 = sbr.rel (%p169) target = $region16
        $region15: #{tpu_custom_call.1} parent=11 // pred_region
          %173 = vsyncadd [#allocation7], 0
          %s174 = sshll.u32 %s1, 4
          %s175 = int_to_ptr.hbm [resolvable:$true] %s174
          %s176 = sshll.u32 [#allocation6], 4
          %s177 = int_to_ptr.vmem [resolvable:$true] %s176
          %182 = dma.hbm_to_vmem [thread:$0]  %s175, 256, %s177, [#allocation7], 64, 64, 4
        $region16: #{tpu_custom_call.1} parent=11 // pred_fallthru
          _
        // Predicated region
        $region17: #{tpu_custom_call.1} parent=11 // pred_check
          %p183 = pneg %p86
        $region18: #{tpu_custom_call.1} parent=11 // pred_check_branch
          %185 = sbr.rel (%p183) target = $region20
        $region19: #{tpu_custom_call.1} parent=11 // pred_region
          _
        $region20: #{tpu_custom_call.1} parent=11 // pred_fallthru
          _
        // Predicated region
        $region21: #{tpu_custom_call.1} parent=11 // pred_check
          %p186 = pneg %p107
        $region22: #{tpu_custom_call.1} parent=11 // pred_check_branch
          %188 = sbr.rel (%p186) target = $region24
        $region23: #{tpu_custom_call.1} parent=11 // pred_region
          %190 = vsyncadd [#allocation7], 0
          %s191 = sshll.u32 %s3, 4
          %s192 = int_to_ptr.hbm [resolvable:$true] %s191
          %s193 = sshll.u32 [#allocation8], 4
          %s194 = int_to_ptr.vmem [resolvable:$true] %s193
          %199 = dma.hbm_to_vmem [thread:$0]  %s192, 256, %s194, [#allocation7], 64, 64, 4
        $region24: #{tpu_custom_call.1} parent=11 // pred_fallthru
          _
        // Predicated region
        $region25: #{tpu_custom_call.1} parent=11 // pred_check
          %p200 = pneg %p128
        $region26: #{tpu_custom_call.1} parent=11 // pred_check_branch
          %202 = sbr.rel (%p200) target = $region28
        $region27: #{tpu_custom_call.1} parent=11 // pred_region
          _
        $region28: #{tpu_custom_call.1} parent=11 // pred_fallthru
          _
      $region12: #{tpu_custom_call.1} parent=5 // pred_fallthru
        _
      %p203 = scmp.lt.s32.totalorder %s18, 2
      // Predicated region
      $region29: #{tpu_custom_call.1} parent=5 // pred_check
        %p204 = pneg %p203
      $region30: #{tpu_custom_call.1} parent=5 // pred_check_branch
        %206 = sbr.rel (%p204) target = $region32
      $region31: #{tpu_custom_call.1} parent=5 // pred_region
        // Predicated region
        $region33: #{tpu_custom_call.1} parent=31 // pred_check
          %p207 = pneg %p38
        $region34: #{tpu_custom_call.1} parent=31 // pred_check_branch
          %209 = sbr.rel (%p207) target = $region36
        $region35: #{tpu_custom_call.1} parent=31 // pred_region
          %s210 = sand.u32 %s28, 1
          %s211 = scalar_lea.sflag [#allocation4], %s210
          %s212 = sand.u32 %s28, 1
          %s213 = smul.addr %s212, 4
          %s214 = scalar_lea.vmem [#allocation3], %s213
          %216 = vsyncadd %s211, 0
          %s217 = smul.addr %s18, 4
          %s218 = scalar_lea.hbm %s0, %s217
          %s220 = sshll.u32 %s218, 4
          %s221 = int_to_ptr.hbm [resolvable:$true] %s220
          %s222 = sshll.u32 %s214, 4
          %s223 = int_to_ptr.vmem [resolvable:$true] %s222
          %225 = dma.hbm_to_vmem [thread:$0]  %s221, 64, %s223, %s211
        $region36: #{tpu_custom_call.1} parent=31 // pred_fallthru
          _
      $region32: #{tpu_custom_call.1} parent=5 // pred_fallthru
        _
      %p226 = scmp.le.s32.totalorder 1, %s18
      %p227 = scmp.lt.s32.totalorder %s18, 3
      %p228 = pnand %p226, %p227
      %p229 = pneg %p228
      // Predicated region
      $region37: #{tpu_custom_call.1} parent=5 // pred_check
        _
      $region38: #{tpu_custom_call.1} parent=5 // pred_check_branch
        %231 = sbr.rel (%p228) target = $region40
      $region39: #{tpu_custom_call.1} parent=5 // pred_region
        %s232 = ssub.s32 %s18, 1
        %s233 = sand.u32 %s31, 1
        %s234 = scalar_lea.sflag [#allocation4], %s233
        %s235 = sand.u32 %s31, 1
        %s236 = smul.addr %s235, 4
        %s237 = scalar_lea.vmem [#allocation3], %s236
        // Predicated region
        $region41: #{tpu_custom_call.1} parent=39 // pred_check
          %p238 = pneg %p44
        $region42: #{tpu_custom_call.1} parent=39 // pred_check_branch
          %240 = sbr.rel (%p238) target = $region44
        $region43: #{tpu_custom_call.1} parent=39 // pred_region
          %242 = dma.done %s234, 64
        $region44: #{tpu_custom_call.1} parent=39 // pred_fallthru
          _
        // Predicated region
        $region45: #{tpu_custom_call.1} parent=39 // pred_check
          %p243 = pneg %p65
        $region46: #{tpu_custom_call.1} parent=39 // pred_check_branch
          %245 = sbr.rel (%p243) target = $region48
        $region47: #{tpu_custom_call.1} parent=39 // pred_region
          %247 = dma.done [#allocation7], 256
        $region48: #{tpu_custom_call.1} parent=39 // pred_fallthru
          _
        // Predicated region
        $region49: #{tpu_custom_call.1} parent=39 // pred_check
          %p248 = pneg %p107
        $region50: #{tpu_custom_call.1} parent=39 // pred_check_branch
          %250 = sbr.rel (%p248) target = $region52
        $region51: #{tpu_custom_call.1} parent=39 // pred_region
          %252 = dma.done [#allocation7], 256
        $region52: #{tpu_custom_call.1} parent=39 // pred_fallthru
          _
        %s253 = sand.u32 %s31, 1
        %s254 = scalar_lea.sflag [#allocation4], %s253
        %s255 = sand.u32 %s31, 1
        %s256 = smul.addr %s255, 4
        %s257 = scalar_lea.vmem [#allocation3], %s256
        %p258 = pneg %p44
        %p259 = pneg %p41
        %p260 = pneg %p65
        %p261 = pneg %p62
        %p262 = pneg %p86
        %p263 = pneg %p83
        %p264 = pneg %p107
        %p265 = pneg %p104
        %p266 = pneg %p128
        %p267 = pneg %p125
        %p268 = pneg %p154
        %p269 = pneg %p151
        %s270 = sand.u32 %s141, 1
        %s271 = scalar_lea.sflag [#allocation5], %s270
        %s272 = sand.u32 %s141, 1
        %s273 = smul.addr %s272, 8
        %s274 = scalar_lea.vmem [#allocation9], %s273
        %v276 = vld [vmem:[%s237] sm:$0xf]
        %v277 = vld [vmem:[#allocation6] sm:$0xf]
        %v278 = vld [vmem:[#allocation6 + $0x4] sm:$0xf]
        %v279 = vld [vmem:[#allocation6 + $0x8] sm:$0xf]
        %v280 = vld [vmem:[#allocation6 + $0xc] sm:$0xf]
        %v281 = vld [vmem:[%s2] sm:$0x1]
        %v283 = vperm.slane %v281, 0
        %v289 = vunpack.c.l.b16 %v277
        %v290 = vunpack.c.l.b16 %v278
        %v291 = vunpack.c.l.b16 %v279
        %v292 = vunpack.c.l.b16 %v280
        %v293 = vpack.c.b16 %v290, %v289
        %v294 = vpack.c.b16 %v292, %v291
        %vm297 = vcmask 261120
        %v299 = vsel %vm297, %v276, 0
        %301 = vmatpush.bf16.msra.mxu0 0
        %302 = vmatpush.bf16.msra.mxu0 0
        %303 = vmatpush.bf16.msra.mxu0 0
        %304 = vmatpush.bf16.msra.mxu0 0
        %305 = vmatpush.bf16.msra.mxu0 0
        %306 = vmatpush.bf16.msra.mxu0 0
        %307 = vmatpush.bf16.msra.mxu0 %v294
        %308 = vmatpush.bf16.msra.mxu0 %v293
        %309 = vmatmul.bf16.gmra.mxu0 %v299
        %v310 = vpop.f32.mrf.mxu0
        %v311 = vadd.f32 %v283, %v310
        %v312 = vpop.f32.mrf.mxu0
        %313 = vdwg.mxu0
        %v314 = vpack.c.bf16 %v311, %v311
        %v316 = vunpack.c.l.b16 %v314
        %v317 = vpack.c.b16 %v316, %v316
        %318 = vrot.lane.b32.xlu0 %v317, 96
        %v319 = vpop.permute.xlu0 %318
        %vm320 = vcmask 64512
        %v322 = vsel %vm320, %v314, 0
        %v325 = vsel %vm320, %v319, 0
        %327 = vmatpush.bf16.xpose.msra.mxu0 0
        %328 = vmatpush.bf16.xpose.msra.mxu0 0
        %329 = vmatpush.bf16.xpose.msra.mxu0 0
        %330 = vmatpush.bf16.xpose.msra.mxu0 0
        %331 = vmatpush.bf16.xpose.msra.mxu0 0
        %332 = vmatpush.bf16.xpose.msra.mxu0 0
        %333 = vmatpush.bf16.xpose.msra.mxu0 0
        %334 = vmatpush.bf16.xpose.msra.mxu0 %v325
        %335 = vmatmul.bf16.gmra.mxu0 %v322
        %v336 = vpop.f32.mrf.mxu0
        %v337 = vadd.f32 0.0, %v336
        %v338 = vpop.f32.mrf.mxu0
        %339 = vdwg.mxu0
        %v340 = vsel %vm320, %v337, -inf
        %341 = vmax.xlane.f32.xlu0 %v340
        %v342 = vpop.xlane.xlu0 %341
        %v343 = vsub.f32 %v337, %v342
        %v344 = vmul.f32 %v343, 1.442695
        %v345 = vpow.pop %v344
        %v346 = vsel %vm320, %v345, 0.0
        %347 = vadd.xlane.f32.xlu0 %v346
        %v348 = vpop.xlane.xlu0 %347
        %v349 = vpack.c.bf16 %v345, %v345
        %350 = vrot.lane.b32.xlu0 %v317, 64
        %v351 = vpop.permute.xlu0 %350
        %v353 = vsel %vm320, %v349, 0
        %vm355 = vcmask 1043456
        %v357 = vsel %vm355, %v351, 0
        %359 = vmatpush.bf16.msra.mxu0 0
        %360 = vmatpush.bf16.msra.mxu0 0
        %361 = vmatpush.bf16.msra.mxu0 0
        %362 = vmatpush.bf16.msra.mxu0 0
        %363 = vmatpush.bf16.msra.mxu0 0
        %364 = vmatpush.bf16.msra.mxu0 0
        %365 = vmatpush.bf16.msra.mxu0 0
        %366 = vmatpush.bf16.msra.mxu0 %v357
        %367 = vmatmul.bf16.gmra.mxu0 %v353
        %v368 = vpop.f32.mrf.mxu0
        %v369 = vadd.f32 0.0, %v368
        %v370 = vpop.f32.mrf.mxu0
        %371 = vdwg.mxu0
        %v372 = vrcp.pop %v348
        %v373 = vmul.f32 %v369, %v372
        %v374 = vpack.c.bf16 %v373, %v373
        %vm375 = vcmask 60416
        %376 = vst.msk [vmem:[#allocation2] sm:$0xf] %vm375, %v374
        %377 = vrot.lane.b32.xlu0 %v317, 120
        %v378 = vpop.permute.xlu0 %377
        %379 = vrot.lane.b32.xlu0 %v317, 88
        %v380 = vpop.permute.xlu0 %379
        %v382 = vsel %vm320, %v378, 0
        %v385 = vsel %vm320, %v380, 0
        %387 = vmatpush.bf16.xpose.msra.mxu0 0
        %388 = vmatpush.bf16.xpose.msra.mxu0 0
        %389 = vmatpush.bf16.xpose.msra.mxu0 0
        %390 = vmatpush.bf16.xpose.msra.mxu0 0
        %391 = vmatpush.bf16.xpose.msra.mxu0 0
        %392 = vmatpush.bf16.xpose.msra.mxu0 0
        %393 = vmatpush.bf16.xpose.msra.mxu0 0
        %394 = vmatpush.bf16.xpose.msra.mxu0 %v385
        %395 = vmatmul.bf16.gmra.mxu0 %v382
        %v396 = vpop.f32.mrf.mxu0
        %v397 = vadd.f32 0.0, %v396
        %v398 = vpop.f32.mrf.mxu0
        %399 = vdwg.mxu0
        %v400 = vsel %vm320, %v397, -inf
        %401 = vmax.xlane.f32.xlu0 %v400
        %v402 = vpop.xlane.xlu0 %401
        %v403 = vsub.f32 %v397, %v402
        %v404 = vmul.f32 %v403, 1.442695
        %v405 = vpow.pop %v404
        %v406 = vsel %vm320, %v405, 0.0
        %407 = vadd.xlane.f32.xlu0 %v406
        %v408 = vpop.xlane.xlu0 %407
        %v409 = vpack.c.bf16 %v405, %v405
        %410 = vrot.lane.b32.xlu0 %v317, 56
        %v411 = vpop.permute.xlu0 %410
        %v413 = vsel %vm320, %v409, 0
        %v416 = vsel %vm355, %v411, 0
        %418 = vmatpush.bf16.msra.mxu0 0
        %419 = vmatpush.bf16.msra.mxu0 0
        %420 = vmatpush.bf16.msra.mxu0 0
        %421 = vmatpush.bf16.msra.mxu0 0
        %422 = vmatpush.bf16.msra.mxu0 0
        %423 = vmatpush.bf16.msra.mxu0 0
        %424 = vmatpush.bf16.msra.mxu0 0
        %425 = vmatpush.bf16.msra.mxu0 %v416
        %426 = vmatmul.bf16.gmra.mxu0 %v413
        %v427 = vpop.f32.mrf.mxu0
        %v428 = vadd.f32 0.0, %v427
        %v429 = vpop.f32.mrf.mxu0
        %430 = vdwg.mxu0
        %v431 = vrcp.pop %v408
        %v432 = vmul.f32 %v428, %v431
        %v433 = vpack.c.bf16 %v432, %v432
        %435 = vrot.lane.b32.xlu0 %v433, 8
        %v436 = vpop.permute.xlu0 %435
        %vm438 = vcmask 126016
        %439 = vst.msk [vmem:[#allocation2] sm:$0xf] %vm438, %v436
        %440 = vrot.lane.b32.xlu0 %v317, 112
        %v441 = vpop.permute.xlu0 %440
        %442 = vrot.lane.b32.xlu0 %v317, 80
        %v443 = vpop.permute.xlu0 %442
        %v445 = vsel %vm320, %v441, 0
        %v448 = vsel %vm320, %v443, 0
        %450 = vmatpush.bf16.xpose.msra.mxu0 0
        %451 = vmatpush.bf16.xpose.msra.mxu0 0
        %452 = vmatpush.bf16.xpose.msra.mxu0 0
        %453 = vmatpush.bf16.xpose.msra.mxu0 0
        %454 = vmatpush.bf16.xpose.msra.mxu0 0
        %455 = vmatpush.bf16.xpose.msra.mxu0 0
        %456 = vmatpush.bf16.xpose.msra.mxu0 0
        %457 = vmatpush.bf16.xpose.msra.mxu0 %v448
        %458 = vmatmul.bf16.gmra.mxu0 %v445
        %v459 = vpop.f32.mrf.mxu0
        %v460 = vadd.f32 0.0, %v459
        %v461 = vpop.f32.mrf.mxu0
        %462 = vdwg.mxu0
        %v463 = vsel %vm320, %v460, -inf
        %464 = vmax.xlane.f32.xlu0 %v463
        %v465 = vpop.xlane.xlu0 %464
        %v466 = vsub.f32 %v460, %v465
        %v467 = vmul.f32 %v466, 1.442695
        %v468 = vpow.pop %v467
        %v469 = vsel %vm320, %v468, 0.0
        %470 = vadd.xlane.f32.xlu0 %v469
        %v471 = vpop.xlane.xlu0 %470
        %v472 = vpack.c.bf16 %v468, %v468
        %473 = vrot.lane.b32.xlu0 %v317, 48
        %v474 = vpop.permute.xlu0 %473
        %v476 = vsel %vm320, %v472, 0
        %v479 = vsel %vm355, %v474, 0
        %481 = vmatpush.bf16.msra.mxu0 0
        %482 = vmatpush.bf16.msra.mxu0 0
        %483 = vmatpush.bf16.msra.mxu0 0
        %484 = vmatpush.bf16.msra.mxu0 0
        %485 = vmatpush.bf16.msra.mxu0 0
        %486 = vmatpush.bf16.msra.mxu0 0
        %487 = vmatpush.bf16.msra.mxu0 0
        %488 = vmatpush.bf16.msra.mxu0 %v479
        %489 = vmatmul.bf16.gmra.mxu0 %v476
        %v490 = vpop.f32.mrf.mxu0
        %v491 = vadd.f32 0.0, %v490
        %v492 = vpop.f32.mrf.mxu0
        %493 = vdwg.mxu0
        %v494 = vrcp.pop %v471
        %v495 = vmul.f32 %v491, %v494
        %v496 = vpack.c.bf16 %v495, %v495
        %498 = vrot.lane.b32.xlu0 %v496, 16
        %v499 = vpop.permute.xlu0 %498
        %vm501 = vcmask 191616
        %502 = vst.msk [vmem:[#allocation2] sm:$0xf] %vm501, %v499
        %503 = vrot.lane.b32.xlu0 %v317, 104
        %v504 = vpop.permute.xlu0 %503
        %505 = vrot.lane.b32.xlu0 %v317, 72
        %v506 = vpop.permute.xlu0 %505
        %v508 = vsel %vm320, %v504, 0
        %v511 = vsel %vm320, %v506, 0
        %513 = vmatpush.bf16.xpose.msra.mxu0 0
        %514 = vmatpush.bf16.xpose.msra.mxu0 0
        %515 = vmatpush.bf16.xpose.msra.mxu0 0
        %516 = vmatpush.bf16.xpose.msra.mxu0 0
        %517 = vmatpush.bf16.xpose.msra.mxu0 0
        %518 = vmatpush.bf16.xpose.msra.mxu0 0
        %519 = vmatpush.bf16.xpose.msra.mxu0 0
        %520 = vmatpush.bf16.xpose.msra.mxu0 %v511
        %521 = vmatmul.bf16.gmra.mxu0 %v508
        %v522 = vpop.f32.mrf.mxu0
        %v523 = vadd.f32 0.0, %v522
        %v524 = vpop.f32.mrf.mxu0
        %525 = vdwg.mxu0
        %v526 = vsel %vm320, %v523, -inf
        %527 = vmax.xlane.f32.xlu0 %v526
        %v528 = vpop.xlane.xlu0 %527
        %v529 = vsub.f32 %v523, %v528
        %v530 = vmul.f32 %v529, 1.442695
        %v531 = vpow.pop %v530
        %v532 = vsel %vm320, %v531, 0.0
        %533 = vadd.xlane.f32.xlu0 %v532
        %v534 = vpop.xlane.xlu0 %533
        %v535 = vpack.c.bf16 %v531, %v531
        %536 = vrot.lane.b32.xlu0 %v317, 40
        %v537 = vpop.permute.xlu0 %536
        %v539 = vsel %vm320, %v535, 0
        %v542 = vsel %vm355, %v537, 0
        %544 = vmatpush.bf16.msra.mxu0 0
        %545 = vmatpush.bf16.msra.mxu0 0
        %546 = vmatpush.bf16.msra.mxu0 0
        %547 = vmatpush.bf16.msra.mxu0 0
        %548 = vmatpush.bf16.msra.mxu0 0
        %549 = vmatpush.bf16.msra.mxu0 0
        %550 = vmatpush.bf16.msra.mxu0 0
        %551 = vmatpush.bf16.msra.mxu0 %v542
        %552 = vmatmul.bf16.gmra.mxu0 %v539
        %v553 = vpop.f32.mrf.mxu0
        %v554 = vadd.f32 0.0, %v553
        %v555 = vpop.f32.mrf.mxu0
        %556 = vdwg.mxu0
        %v557 = vrcp.pop %v534
        %v558 = vmul.f32 %v554, %v557
        %v559 = vpack.c.bf16 %v558, %v558
        %561 = vrot.lane.b32.xlu0 %v559, 24
        %v562 = vpop.permute.xlu0 %561
        %vm564 = vcmask 257216
        %565 = vst.msk [vmem:[#allocation2] sm:$0xf] %vm564, %v562
        %v566 = vld [vmem:[#allocation2] sm:$0xf]
        %v567 = vld [vmem:[#allocation8] sm:$0xf]
        %v568 = vld [vmem:[#allocation8 + $0x4] sm:$0xf]
        %v569 = vld [vmem:[#allocation8 + $0x8] sm:$0xf]
        %v570 = vld [vmem:[#allocation8 + $0xc] sm:$0xf]
        %v571 = vld [vmem:[%s4] sm:$0x1]
        %v573 = vperm.slane %v571, 0
        %v579 = vunpack.c.l.b16 %v567
        %v580 = vunpack.c.l.b16 %v568
        %v581 = vunpack.c.l.b16 %v569
        %v582 = vunpack.c.l.b16 %v570
        %v583 = vpack.c.b16 %v580, %v579
        %v584 = vpack.c.b16 %v582, %v581
        %v588 = vsel %vm297, %v566, 0
        %590 = vmatpush.bf16.msra.mxu0 0
        %591 = vmatpush.bf16.msra.mxu0 0
        %592 = vmatpush.bf16.msra.mxu0 0
        %593 = vmatpush.bf16.msra.mxu0 0
        %594 = vmatpush.bf16.msra.mxu0 0
        %595 = vmatpush.bf16.msra.mxu0 0
        %596 = vmatpush.bf16.msra.mxu0 %v584
        %597 = vmatpush.bf16.msra.mxu0 %v583
        %598 = vmatmul.bf16.gmra.mxu0 %v588
        %v599 = vpop.f32.mrf.mxu0
        %v600 = vadd.f32 %v573, %v599
        %v601 = vpop.f32.mrf.mxu0
        %602 = vdwg.mxu0
        %603 = vst.msk [vmem:[%s274] sm:$0xff] %vm297, %v600
        %s604 = sand.u32 %s141, 1
        %s605 = scalar_lea.sflag [#allocation5], %s604
        %s606 = sand.u32 %s141, 1
        %s607 = smul.addr %s606, 8
        %s608 = scalar_lea.vmem [#allocation9], %s607
        // Predicated region
        $region53: #{tpu_custom_call.1} parent=39 // pred_check
          %p609 = pneg %p151
        $region54: #{tpu_custom_call.1} parent=39 // pred_check_branch
          %611 = sbr.rel (%p609) target = $region56
        $region55: #{tpu_custom_call.1} parent=39 // pred_region
          %613 = vsyncadd %s605, 0
          %s614 = smul.addr %s23, 8
          %s615 = scalar_lea.hbm %s5, %s614
          %s617 = sshll.u32 %s608, 4
          %s618 = int_to_ptr.vmem [resolvable:$true] %s617
          %s619 = sshll.u32 %s615, 4
          %s620 = int_to_ptr.hbm [resolvable:$true] %s619
          %622 = dma.vmem_to_hbm [thread:$0]  %s618, 128, %s620, %s605
        $region56: #{tpu_custom_call.1} parent=39 // pred_fallthru
          _
      $region40: #{tpu_custom_call.1} parent=5 // pred_fallthru
        _
      %p623 = scmp.le.s32.totalorder 2, %s18
      // Predicated region
      $region57: #{tpu_custom_call.1} parent=5 // pred_check
        %p624 = pneg %p623
      $region58: #{tpu_custom_call.1} parent=5 // pred_check_branch
        %626 = sbr.rel (%p624) target = $region60
      $region59: #{tpu_custom_call.1} parent=5 // pred_region
        %s627 = ssub.s32 %s18, 2
        // Predicated region
        $region61: #{tpu_custom_call.1} parent=59 // pred_check
          %p628 = pneg %p157
        $region62: #{tpu_custom_call.1} parent=59 // pred_check_branch
          %630 = sbr.rel (%p628) target = $region64
        $region63: #{tpu_custom_call.1} parent=59 // pred_region
          %s631 = sand.u32 %s142, 1
          %s632 = scalar_lea.sflag [#allocation5], %s631
          %s633 = sand.u32 %s142, 1
          %s634 = smul.addr %s633, 8
          %s635 = scalar_lea.vmem [#allocation9], %s634
          %637 = dma.done %s632, 128
        $region64: #{tpu_custom_call.1} parent=59 // pred_fallthru
          _
      $region60: #{tpu_custom_call.1} parent=5 // pred_fallthru
        _
    $region6: #{tpu_custom_call.1} parent=1 // loop_footer
      %s22 = sadd.s32 1, %s18
    $region7: #{tpu_custom_call.1} parent=1 // loop_footer_branch
      %17 = sbr.rel target = $region3
    $region8: #{tpu_custom_call.1} parent=1 // loop_exit
      _
    %638 = vsyncpa [#allocation4], 1
    %s639 = scalar_lea.sflag [#allocation4], 1
    %640 = vsyncpa %s639, 1
    %641 = vsyncpa [#allocation7], 1
    %642 = vsyncpa [#allocation5], 1
    %s643 = scalar_lea.sflag [#allocation5], 1
    %644 = vsyncpa %s643, 1

</llo_original>
